<compile_context>
chip_gen: v5e
topology: v5e:2x2
jax: 0.10.0
libtpu: 0.0.40
codegen_flags: <defaults>
</compile_context>

<pallas_src>
import jax
import jax.numpy as jnp
from jax.experimental import pallas as pl
from jax.experimental.pallas import tpu as pltpu


def _round_up(n, m):
    return ((n + m - 1) // m) * m


def _lane_pad(n):
    # Last-dim VMEM footprint is padded to a full 128-lane vreg row.
    return _round_up(max(int(n), 1), 128)


def _gumbel_softmax_kernel(x_ref, w1_ref, b1_ref, w2_ref, b2_ref, o_ref):
    # x_ref : (tile_m, d_in)          VMEM, streamed per grid step (f32 or bf16)
    # w1_ref: (d_in, mid)             VMEM, resident (constant index_map), dtype of x
    # b1_ref: (1, mid)     f32        VMEM, resident
    # w2_ref: (mid, ncls)  f32        VMEM, resident
    # b2_ref: (1, ncls)    f32        VMEM, resident
    # o_ref : (1, tile_m // 128, 128) VMEM, lane-dense output slab
    x = x_ref[...]

    # MLP: Linear -> ReLU -> (dropout = identity in eval) -> Linear.
    # Both dots accumulate in f32 on the MXU; the second dot runs fully in f32 so the
    # accumulator is never rounded through bf16 (tiny K/N, cost is irrelevant).
    h = jnp.dot(x, w1_ref[...], preferred_element_type=jnp.float32)
    h = jnp.maximum(h + b1_ref[...], 0.0)
    logits = jnp.dot(h, w2_ref[...], preferred_element_type=jnp.float32) + b2_ref[...]

    # argmax(log_softmax(logits)) == num_cls - 1
    #   <=>  last-class logit strictly greater than every earlier class logit.
    # (log_softmax is a per-row monotone shift, so it is dropped; strict '>' preserves
    #  first-index tie-breaking: an exact tie never selects the last class.)
    num_cls = logits.shape[-1]
    last = logits[:, num_cls - 1:]                                         # (tile_m, 1)
    best_rest = jnp.max(logits[:, : num_cls - 1], axis=-1, keepdims=True)  # (tile_m, 1)
    hit = (last > best_rest).astype(o_ref.dtype)                           # (tile_m, 1)

    # Sublane column -> lane-dense slab (see TODO at top about auditing this relayout).
    o_ref[...] = hit.reshape(o_ref.shape)


def _device_tile_budget():
    """(tile_m cap, VMEM byte budget for streamed blocks) for the local TPU generation."""
    cap, budget = 4096, 16 << 20                # conservative fallback
    try:
        kind = jax.devices()[0].device_kind.lower()
    except Exception:
        return cap, budget
    if "v5 lite" in kind or "v5e" in kind:
        cap, budget = 4096, 12 << 20            # ~0.82 TB/s HBM: bigger tiles buy ~nothing
    elif "v6" in kind:
        cap, budget = 16384, 48 << 20           # 128 MiB physical VMEM: amortize step overhead
    elif "v7" in kind or "7x" in kind:
        cap, budget = 8192, 24 << 20            # 64 MiB physical VMEM shared by 2 TensorCores
    return cap, budget


def gumbel_softmax_forward(rel, w1, b1, w2, b2, *, tile_m=None, out_dtype=None):
    """Eval-path forward of GumbelSoftmax.

    rel: [..., d_in]; returns mask of shape rel.shape[:-1] with values in {0, 1}.
    rel / w1 may be float32 or bfloat16 (bf16 halves HBM read traffic); both matmuls
    accumulate in f32 and the tiny second layer always runs in f32.
    The mask dtype defaults to rel.dtype (override with out_dtype=).
    """
    d_in = rel.shape[-1]
    mid = w1.shape[1]
    num_cls = w2.shape[1]
    assert num_cls >= 2, "need at least 2 classes"
    lead_shape = rel.shape[:-1]
    if out_dtype is None:
        out_dtype = rel.dtype

    x = rel.reshape(-1, d_in)      # free: contiguous leading-dim merge
    M = x.shape[0]

    # Only truly tiny inputs get padded (to one 128-row block).  Everything else runs
    # WITHOUT a pre-pad copy: the last grid block may read past M; those garbage rows
    # are row-independent through the MLP and are sliced off below.
    if M < 128:
        x = jnp.pad(x, ((0, 128 - M), (0, 0)))
    M_rows = x.shape[0]

    # Big first-layer weight streams in the same dtype as x; tiny second layer + biases
    # stay f32 (accuracy; negligible VMEM/HBM cost).
    w1 = w1.astype(x.dtype)
    b1 = b1.astype(jnp.float32)
    w2 = w2.astype(jnp.float32)
    b2 = b2.astype(jnp.float32)

    # Lane-padded per-row VMEM bytes: x double-buffered (input dtype) + f32 h / logits /
    # hit-column intermediates (each padded to a full 128-lane vreg row).
    cap, budget = _device_tile_budget()
    per_row = (2 * _lane_pad(d_in) * x.dtype.itemsize
               + 4 * (_lane_pad(mid) + _lane_pad(num_cls) + 2 * 128))

    auto = tile_m is None
    if auto:
        tile_m = max(256, min(cap, (budget // per_row) // 128 * 128))
    assert tile_m % 128 == 0, "tile_m must be a multiple of 128 (lane width)"
    # Blocks must not start past the end of the array.
    tile_m = min(tile_m, max(128, (M_rows // 128) * 128))

    grid_m = pl.cdiv(M_rows, tile_m)
    if auto and grid_m % 2 == 1 and M_rows > 128:
        # Prefer an even step count so both v7x TensorCores get equal work.
        cand = _round_up(pl.cdiv(M_rows, grid_m + 1), 128)
        if cand >= 128 and pl.cdiv(M_rows, cand) % 2 == 0:
            tile_m = cand
            grid_m = pl.cdiv(M_rows, cand)

    rows = tile_m // 128
    vmem_limit = int(min(100 << 20, max(32 << 20, 2 * per_row * tile_m + (4 << 20))))

    out = pl.pallas_call(
        _gumbel_softmax_kernel,
        out_shape=jax.ShapeDtypeStruct((grid_m, rows, 128), out_dtype),
        grid_spec=pltpu.PrefetchScalarGridSpec(
            num_scalar_prefetch=0,
            grid=(grid_m,),
            in_specs=[
                pl.BlockSpec((tile_m, d_in), lambda i: (i, 0)),
                # Tiny parameters: constant block index -> fetched once, stay resident.
                pl.BlockSpec((d_in, mid), lambda i: (0, 0)),
                pl.BlockSpec((1, mid), lambda i: (0, 0)),
                pl.BlockSpec((mid, num_cls), lambda i: (0, 0)),
                pl.BlockSpec((1, num_cls), lambda i: (0, 0)),
            ],
            # Lane-dense output slab per step (last two block dims == full array dims).
            out_specs=pl.BlockSpec((1, rows, 128), lambda i: (i, 0, 0)),
        ),
        compiler_params=pltpu.CompilerParams(
            dimension_semantics=("parallel",),
            vmem_limit_bytes=vmem_limit,
        ),
    )(x, w1, b1, w2, b2)

    flat = out.reshape(grid_m * tile_m)
    if grid_m * tile_m != M:
        flat = flat[:M]                 # drop ragged-block garbage rows (tiny copy)
    return flat.reshape(lead_shape)


def _reference_forward(rel, w1, b1, w2, b2):
    """Pure-JAX reference of the eval forward path (mirrors the PyTorch module)."""
    h = jnp.maximum(rel @ w1 + b1[0], 0.0)
    logits = h @ w2 + b2[0]
    logp = jax.nn.log_softmax(logits, axis=-1)
    idx = jnp.argmax(logp, axis=-1)
    return (idx == (logits.shape[-1] - 1)).astype(jnp.float32)


if __name__ == "__main__":
    # Small shapes consistent with the module: rel is 5-D [B, R, N, N, d_in]
    B, R, N, d_in, num_cls = 2, 4, 8, 32, 3
    mid = d_in // 2

    key = jax.random.PRNGKey(0)
    k_rel, k_w1, k_b1, k_w2, k_b2, k_rel2 = jax.random.split(key, 6)

    rel = jax.random.normal(k_rel, (B, R, N, N, d_in), dtype=jnp.float32)
    # Deterministic parameter init (synthetic, not a checkpoint load)
    w1 = jax.random.normal(k_w1, (d_in, mid), dtype=jnp.float32) * 0.1
    b1 = jax.random.normal(k_b1, (1, mid), dtype=jnp.float32) * 0.1
    w2 = jax.random.normal(k_w2, (mid, num_cls), dtype=jnp.float32) * 0.1
    b2 = jax.random.normal(k_b2, (1, num_cls), dtype=jnp.float32) * 0.1

    # f32 path (M = 512 rows): discrete mask must match the pure-JAX reference exactly.
    mask = gumbel_softmax_forward(rel, w1, b1, w2, b2)
    jax.block_until_ready(mask)
    ref = _reference_forward(rel, w1, b1, w2, b2)
    assert mask.shape == (B, R, N, N), mask.shape
    assert mask.dtype == jnp.float32, mask.dtype
    assert jnp.array_equal(mask, ref), "Pallas f32 output mismatch vs JAX reference"

    # Ragged path (M = 294 rows, not a multiple of the tile): the last grid block reads
    # past M; the garbage rows are row-independent and sliced off, so results still
    # match the reference exactly on the valid rows.
    rel2 = jax.random.normal(k_rel2, (2, 3, 7, 7, d_in), dtype=jnp.float32)
    mask2 = gumbel_softmax_forward(rel2, w1, b1, w2, b2)
    jax.block_until_ready(mask2)
    ref2 = _reference_forward(rel2, w1, b1, w2, b2)
    assert mask2.shape == (2, 3, 7, 7), mask2.shape
    assert jnp.array_equal(mask2, ref2), "Pallas ragged-block output mismatch vs reference"

    # bf16 streaming path: halves HBM read traffic (and the mask write, since the output
    # follows rel.dtype); the second layer stays f32, so only near-tie rows may flip.
    mask_bf16 = gumbel_softmax_forward(
        rel.astype(jnp.bfloat16), w1.astype(jnp.bfloat16), b1, w2, b2)
    jax.block_until_ready(mask_bf16)
    assert mask_bf16.shape == (B, R, N, N), mask_bf16.shape
    assert mask_bf16.dtype == jnp.bfloat16, mask_bf16.dtype
    mismatch_frac = float(jnp.mean(jnp.abs(mask_bf16.astype(jnp.float32) - ref)))
    assert mismatch_frac < 0.05, f"bf16 path diverged too much: {mismatch_frac}"

    print("KERNEL_OK")
</pallas_src>

<mosaic_0001>
module attributes {stable_mosaic.version = 11 : i64} {
  func.func @_gumbel_softmax_kernel(%arg0: i32, %arg1: memref<256x32xf32, #tpu.memory_space<vmem>>, %arg2: memref<32x16xf32, #tpu.memory_space<vmem>>, %arg3: memref<1x16xf32, #tpu.memory_space<vmem>>, %arg4: memref<16x3xf32, #tpu.memory_space<vmem>>, %arg5: memref<1x3xf32, #tpu.memory_space<vmem>>, %arg6: memref<1x2x128xf32, #tpu.memory_space<vmem>>) attributes {dimension_semantics = [#tpu.dimension_semantics<parallel>], iteration_bounds = array<i64: 2>, scalar_prefetch = 0 : i64, scratch_operands = 0 : i64, tpu.core_type = #tpu.core_type<tc>, window_params = [{transform_indices = @transform_0, window_bounds = array<i64: 256, 32>}, {pipeline_mode = #tpu.pipeline_mode<synchronous>, transform_indices = @transform_1, window_bounds = array<i64: 32, 16>}, {pipeline_mode = #tpu.pipeline_mode<synchronous>, transform_indices = @transform_2, window_bounds = array<i64: 1, 16>}, {pipeline_mode = #tpu.pipeline_mode<synchronous>, transform_indices = @transform_3, window_bounds = array<i64: 16, 3>}, {pipeline_mode = #tpu.pipeline_mode<synchronous>, transform_indices = @transform_4, window_bounds = array<i64: 1, 3>}, {transform_indices = @transform_5, window_bounds = array<i64: 1, 2, 128>}]} {
    %c0 = arith.constant 0 : index
    %c0_0 = arith.constant 0 : index
    %0 = vector.load %arg1[%c0, %c0_0] : memref<256x32xf32, #tpu.memory_space<vmem>>, vector<256x32xf32>
    %c0_1 = arith.constant 0 : index
    %c0_2 = arith.constant 0 : index
    %1 = vector.load %arg2[%c0_1, %c0_2] : memref<32x16xf32, #tpu.memory_space<vmem>>, vector<32x16xf32>
    %cst = arith.constant dense<0.000000e+00> : vector<256x16xf32>
    %2 = tpu.matmul %0, %1, %cst {dimension_numbers = #tpu.dot_dimension_numbers<[1], [0], [0], [1], [0, 0, 1, 1], [], []>} : vector<256x32xf32>, vector<32x16xf32>, vector<256x16xf32> -> vector<256x16xf32>
    %c0_3 = arith.constant 0 : index
    %c0_4 = arith.constant 0 : index
    %3 = vector.load %arg3[%c0_3, %c0_4] : memref<1x16xf32, #tpu.memory_space<vmem>>, vector<1x16xf32>
    %4 = vector.broadcast %3 : vector<1x16xf32> to vector<256x16xf32>
    %5 = arith.addf %2, %4 : vector<256x16xf32>
    %cst_5 = arith.constant 0.000000e+00 : f32
    %6 = vector.broadcast %cst_5 : f32 to vector<256x16xf32>
    %7 = arith.maximumf %5, %6 : vector<256x16xf32>
    %c0_6 = arith.constant 0 : index
    %c0_7 = arith.constant 0 : index
    %8 = vector.load %arg4[%c0_6, %c0_7] : memref<16x3xf32, #tpu.memory_space<vmem>>, vector<16x3xf32>
    %cst_8 = arith.constant dense<0.000000e+00> : vector<256x3xf32>
    %9 = tpu.matmul %7, %8, %cst_8 {dimension_numbers = #tpu.dot_dimension_numbers<[1], [0], [0], [1], [0, 0, 1, 1], [], []>} : vector<256x16xf32>, vector<16x3xf32>, vector<256x3xf32> -> vector<256x3xf32>
    %c0_9 = arith.constant 0 : index
    %c0_10 = arith.constant 0 : index
    %10 = vector.load %arg5[%c0_9, %c0_10] : memref<1x3xf32, #tpu.memory_space<vmem>>, vector<1x3xf32>
    %11 = vector.broadcast %10 : vector<1x3xf32> to vector<256x3xf32>
    %12 = arith.addf %9, %11 : vector<256x3xf32>
    %13 = vector.extract_strided_slice %12 {offsets = [0, 2], sizes = [256, 1], strides = [1, 1]} : vector<256x3xf32> to vector<256x1xf32>
    %14 = vector.extract_strided_slice %12 {offsets = [0, 0], sizes = [256, 2], strides = [1, 1]} : vector<256x3xf32> to vector<256x2xf32>
    %cst_11 = arith.constant dense<0xFF800000> : vector<256xf32>
    %15 = vector.multi_reduction <maximumf>, %14, %cst_11 [1] : vector<256x2xf32> to vector<256xf32>
    %16 = vector.shape_cast %15 : vector<256xf32> to vector<256x1xf32>
    %17 = arith.cmpf ogt, %13, %16 : vector<256x1xf32>
    %18 = arith.extui %17 : vector<256x1xi1> to vector<256x1xi32>
    %19 = arith.sitofp %18 : vector<256x1xi32> to vector<256x1xf32>
    %20 = vector.shape_cast %19 : vector<256x1xf32> to vector<1x2x128xf32>
    %c0_12 = arith.constant 0 : index
    %c0_13 = arith.constant 0 : index
    %c0_14 = arith.constant 0 : index
    %21 = vector.load %arg6[%c0_12, %c0_13, %c0_14] : memref<1x2x128xf32, #tpu.memory_space<vmem>>, vector<1x2x128xf32>
    tpu.vector_store %arg6[%c0_12, %c0_13, %c0_14], %20 {strides = array<i32>} : memref<1x2x128xf32, #tpu.memory_space<vmem>>, vector<1x2x128xf32>,
    return
  }
  func.func @transform_0(%arg0: i32) -> (i32, i32) {
    %c0_i32 = arith.constant 0 : i32
    %c0_i32_0 = arith.constant 0 : i32
    return %arg0, %c0_i32 : i32, i32
  }
  func.func @transform_1(%arg0: i32) -> (i32, i32) {
    %c0_i32 = arith.constant 0 : i32
    %c0_i32_0 = arith.constant 0 : i32
    %c0_i32_1 = arith.constant 0 : i32
    return %c0_i32, %c0_i32_0 : i32, i32
  }
  func.func @transform_2(%arg0: i32) -> (i32, i32) {
    %c0_i32 = arith.constant 0 : i32
    %c0_i32_0 = arith.constant 0 : i32
    %c0_i32_1 = arith.constant 0 : i32
    return %c0_i32, %c0_i32_0 : i32, i32
  }
  func.func @transform_3(%arg0: i32) -> (i32, i32) {
    %c0_i32 = arith.constant 0 : i32
    %c0_i32_0 = arith.constant 0 : i32
    %c0_i32_1 = arith.constant 0 : i32
    return %c0_i32, %c0_i32_0 : i32, i32
  }
  func.func @transform_4(%arg0: i32) -> (i32, i32) {
    %c0_i32 = arith.constant 0 : i32
    %c0_i32_0 = arith.constant 0 : i32
    %c0_i32_1 = arith.constant 0 : i32
    return %c0_i32, %c0_i32_0 : i32, i32
  }
  func.func @transform_5(%arg0: i32) -> (i32, i32, i32) {
    %c0_i32 = arith.constant 0 : i32
    %c0_i32_0 = arith.constant 0 : i32
    %c0_i32_1 = arith.constant 0 : i32
    return %arg0, %c0_i32, %c0_i32_0 : i32, i32, i32
  }
}

</mosaic_0001>

<llo_original>
// kernel: tpu_custom_call.1
$region0: #{tpu_custom_call.1}
  #allocation0 [shape = 'u32[]', space=smem, size = 0x4, offset = 0x4, fixed_abs, tag = 'smem constant byte address 0x4 - core index']
  #allocation1 [shape = 'u32[72,128]{1,0:T(1,128)}', space=vmem, size = 0x9000, scoped, tag = 'internal scratch']
  %s0 = inlined_call_operand.vmem [shape: f32[512,32], index: 0, kind: input, shape index: {}]
  %s1 = inlined_call_operand.vmem [shape: f32[32,16], index: 1, kind: input, shape index: {}]
  %s2 = inlined_call_operand.vmem [shape: f32[1,16], index: 2, kind: input, shape index: {}]
  %s3 = inlined_call_operand.vmem [shape: f32[16,3], index: 3, kind: input, shape index: {}]
  %s4 = inlined_call_operand.vmem [shape: f32[1,3], index: 4, kind: input, shape index: {}]
  %s5 = inlined_call_operand.hbm [shape: f32[2,2,128], index: 5, kind: output, shape index: {}]
  %s6 = sld [smem:[#allocation0]]
  $region53: #{tpu_custom_call.1} parent=0
    _
  %s8 = ssub.s32 1, %s6
  %s9 = scalar_select 0, %s8, %s6
  $region1: #{tpu_custom_call.1} parent=0
    #allocation2 [shape = 'u8[2048]{0}', space=vmem, size = 0x800, scoped, tag = 'output window, operand 0']
    #allocation3 [shape = 's32[2]{0}', space=sflag, size = 0x8, scoped, tag = 'scoped memory for tpu_custom_call.1']
    %10 = vsyncpa [#allocation3], 0
    %s11 = scalar_lea.sflag [#allocation3], 1
    %12 = vsyncpa %s11, 0
    loop: start=0, step=1, limit=4
    $region2: #{tpu_custom_call.1} parent=1 // loop_pre_header
      _
    $region3: #{tpu_custom_call.1} parent=1 // loop_header
      %s14 = sphi 0, %s18
      %p15 = scmp.ge.s32.totalorder %s14, 4
      %s24 = sphi 0, %s26
      %s27 = sphi 0, %s24
      %s28 = sphi 0, %s27
      %s44 = sphi 0, %s28
      %s48 = sphi 0, %s48
      %s50 = sphi 0, %s48
      %s51 = sphi 0, %s50
      %s65 = sphi 0, %s51
      %s69 = sphi 0, %s69
      %s71 = sphi 0, %s69
      %s72 = sphi 0, %s71
      %s86 = sphi 0, %s72
      %s90 = sphi 0, %s90
      %s92 = sphi 0, %s90
      %s93 = sphi 0, %s92
      %s107 = sphi 0, %s93
      %s111 = sphi 0, %s111
      %s113 = sphi 0, %s111
      %s114 = sphi 0, %s113
      %s128 = sphi 0, %s114
      %s134 = sphi 0, %s136
      %s137 = sphi 0, %s134
      %s138 = sphi 0, %s137
      %s154 = sphi 0, %s138
    $region4: #{tpu_custom_call.1} parent=1 // loop_header_branch
      %17 = sbr.rel (%p15) target = $region8
    $region5: #{tpu_custom_call.1} parent=1 // loop_body
      %s19 = ssub.s32 %s14, 1
      %s20 = ssub.s32 %s14, 2
      %s21 = sadd.s32 %s14, 1
      %s22 = ssub.s32 %s14, %s21
      %p23 = scmp.eq.s32.totalorder %s22, 0
      %s25 = sadd.s32 %s24, 1
      %s26 = scalar_select %p23, %s24, %s25
      %p29 = pneg %p23
      %p30 = scmp.eq.s32.totalorder %s14, 1
      %p31 = por %p29, %p30
      %p32 = scmp.ne.s32.totalorder %s24, %s27
      %p33 = scmp.eq.s32.totalorder %s14, 0
      %p34 = por %p32, %p33
      %p35 = scmp.ne.s32.totalorder %s24, %s27
      %p36 = scmp.eq.s32.totalorder %s19, 1
      %p37 = por %p35, %p36
      %p38 = scmp.ne.s32.totalorder %s27, %s28
      %p39 = scmp.eq.s32.totalorder %s19, 0
      %p40 = por %p38, %p39
      %p41 = scmp.ne.s32.totalorder %s27, %s28
      %p42 = scmp.eq.s32.totalorder %s20, 1
      %p43 = por %p41, %p42
      %p45 = scmp.ne.s32.totalorder %s28, %s44
      %p46 = scmp.eq.s32.totalorder %s20, 0
      %p47 = por %p45, %p46
      %s49 = sadd.s32 %s48, 1
      %p52 = scmp.eq.s32.totalorder %s14, 1
      %p53 = scmp.ne.s32.totalorder %s48, %s50
      %p54 = scmp.eq.s32.totalorder %s14, 0
      %p55 = por %p53, %p54
      %p56 = scmp.ne.s32.totalorder %s48, %s50
      %p57 = scmp.eq.s32.totalorder %s19, 1
      %p58 = por %p56, %p57
      %p59 = scmp.ne.s32.totalorder %s50, %s51
      %p60 = scmp.eq.s32.totalorder %s19, 0
      %p61 = por %p59, %p60
      %p62 = scmp.ne.s32.totalorder %s50, %s51
      %p63 = scmp.eq.s32.totalorder %s20, 1
      %p64 = por %p62, %p63
      %p66 = scmp.ne.s32.totalorder %s51, %s65
      %p67 = scmp.eq.s32.totalorder %s20, 0
      %p68 = por %p66, %p67
      %s70 = sadd.s32 %s69, 1
      %p73 = scmp.eq.s32.totalorder %s14, 1
      %p74 = scmp.ne.s32.totalorder %s69, %s71
      %p75 = scmp.eq.s32.totalorder %s14, 0
      %p76 = por %p74, %p75
      %p77 = scmp.ne.s32.totalorder %s69, %s71
      %p78 = scmp.eq.s32.totalorder %s19, 1
      %p79 = por %p77, %p78
      %p80 = scmp.ne.s32.totalorder %s71, %s72
      %p81 = scmp.eq.s32.totalorder %s19, 0
      %p82 = por %p80, %p81
      %p83 = scmp.ne.s32.totalorder %s71, %s72
      %p84 = scmp.eq.s32.totalorder %s20, 1
      %p85 = por %p83, %p84
      %p87 = scmp.ne.s32.totalorder %s72, %s86
      %p88 = scmp.eq.s32.totalorder %s20, 0
      %p89 = por %p87, %p88
      %s91 = sadd.s32 %s90, 1
      %p94 = scmp.eq.s32.totalorder %s14, 1
      %p95 = scmp.ne.s32.totalorder %s90, %s92
      %p96 = scmp.eq.s32.totalorder %s14, 0
      %p97 = por %p95, %p96
      %p98 = scmp.ne.s32.totalorder %s90, %s92
      %p99 = scmp.eq.s32.totalorder %s19, 1
      %p100 = por %p98, %p99
      %p101 = scmp.ne.s32.totalorder %s92, %s93
      %p102 = scmp.eq.s32.totalorder %s19, 0
      %p103 = por %p101, %p102
      %p104 = scmp.ne.s32.totalorder %s92, %s93
      %p105 = scmp.eq.s32.totalorder %s20, 1
      %p106 = por %p104, %p105
      %p108 = scmp.ne.s32.totalorder %s93, %s107
      %p109 = scmp.eq.s32.totalorder %s20, 0
      %p110 = por %p108, %p109
      %s112 = sadd.s32 %s111, 1
      %p115 = scmp.eq.s32.totalorder %s14, 1
      %p116 = scmp.ne.s32.totalorder %s111, %s113
      %p117 = scmp.eq.s32.totalorder %s14, 0
      %p118 = por %p116, %p117
      %p119 = scmp.ne.s32.totalorder %s111, %s113
      %p120 = scmp.eq.s32.totalorder %s19, 1
      %p121 = por %p119, %p120
      %p122 = scmp.ne.s32.totalorder %s113, %s114
      %p123 = scmp.eq.s32.totalorder %s19, 0
      %p124 = por %p122, %p123
      %p125 = scmp.ne.s32.totalorder %s113, %s114
      %p126 = scmp.eq.s32.totalorder %s20, 1
      %p127 = por %p125, %p126
      %p129 = scmp.ne.s32.totalorder %s114, %s128
      %p130 = scmp.eq.s32.totalorder %s20, 0
      %p131 = por %p129, %p130
      %s132 = ssub.s32 %s14, %s21
      %p133 = scmp.eq.s32.totalorder %s132, 0
      %s135 = sadd.s32 %s134, 1
      %s136 = scalar_select %p133, %s134, %s135
      %p139 = pneg %p133
      %p140 = scmp.eq.s32.totalorder %s14, 1
      %p141 = por %p139, %p140
      %p142 = scmp.ne.s32.totalorder %s134, %s137
      %p143 = scmp.eq.s32.totalorder %s14, 0
      %p144 = por %p142, %p143
      %p145 = scmp.ne.s32.totalorder %s134, %s137
      %p146 = scmp.eq.s32.totalorder %s19, 1
      %p147 = por %p145, %p146
      %p148 = scmp.ne.s32.totalorder %s137, %s138
      %p149 = scmp.eq.s32.totalorder %s19, 0
      %p150 = por %p148, %p149
      %p151 = scmp.ne.s32.totalorder %s137, %s138
      %p152 = scmp.eq.s32.totalorder %s20, 1
      %p153 = por %p151, %p152
      %p155 = scmp.ne.s32.totalorder %s138, %s154
      %p156 = scmp.eq.s32.totalorder %s20, 0
      %p157 = por %p155, %p156
      %p158 = scmp.le.s32.totalorder 1, %s14
      %p159 = scmp.lt.s32.totalorder %s14, 3
      %p160 = pnand %p158, %p159
      %p161 = pneg %p160
      // Predicated region
      $region9: #{tpu_custom_call.1} parent=5 // pred_check
        _
      $region10: #{tpu_custom_call.1} parent=5 // pred_check_branch
        %163 = sbr.rel (%p160) target = $region12
      $region11: #{tpu_custom_call.1} parent=5 // pred_region
        %s164 = ssub.s32 %s14, 1
        // Predicated region
        $region13: #{tpu_custom_call.1} parent=11 // pred_check
          %p165 = pneg %p61
        $region14: #{tpu_custom_call.1} parent=11 // pred_check_branch
          %167 = sbr.rel (%p165) target = $region16
        $region15: #{tpu_custom_call.1} parent=11 // pred_region
          _
        $region16: #{tpu_custom_call.1} parent=11 // pred_fallthru
          _
        // Predicated region
        $region17: #{tpu_custom_call.1} parent=11 // pred_check
          %p168 = pneg %p82
        $region18: #{tpu_custom_call.1} parent=11 // pred_check_branch
          %170 = sbr.rel (%p168) target = $region20
        $region19: #{tpu_custom_call.1} parent=11 // pred_region
          _
        $region20: #{tpu_custom_call.1} parent=11 // pred_fallthru
          _
        // Predicated region
        $region21: #{tpu_custom_call.1} parent=11 // pred_check
          %p171 = pneg %p103
        $region22: #{tpu_custom_call.1} parent=11 // pred_check_branch
          %173 = sbr.rel (%p171) target = $region24
        $region23: #{tpu_custom_call.1} parent=11 // pred_region
          _
        $region24: #{tpu_custom_call.1} parent=11 // pred_fallthru
          _
        // Predicated region
        $region25: #{tpu_custom_call.1} parent=11 // pred_check
          %p174 = pneg %p124
        $region26: #{tpu_custom_call.1} parent=11 // pred_check_branch
          %176 = sbr.rel (%p174) target = $region28
        $region27: #{tpu_custom_call.1} parent=11 // pred_region
          _
        $region28: #{tpu_custom_call.1} parent=11 // pred_fallthru
          _
      $region12: #{tpu_custom_call.1} parent=5 // pred_fallthru
        _
      %p177 = scmp.lt.s32.totalorder %s14, 2
      // Predicated region
      $region29: #{tpu_custom_call.1} parent=5 // pred_check
        %p178 = pneg %p177
      $region30: #{tpu_custom_call.1} parent=5 // pred_check_branch
        %180 = sbr.rel (%p178) target = $region32
      $region31: #{tpu_custom_call.1} parent=5 // pred_region
        // Predicated region
        $region33: #{tpu_custom_call.1} parent=31 // pred_check
          %p181 = pneg %p34
        $region34: #{tpu_custom_call.1} parent=31 // pred_check_branch
          %183 = sbr.rel (%p181) target = $region36
        $region35: #{tpu_custom_call.1} parent=31 // pred_region
          %s184 = smul.u32 32, %s14
          %p185 = scmp.lt.s32.totalorder %s184, 63
          %s186 = scalar_select %p185, %s184, 63
          %s187 = smul.addr %s186, 8
          %s188 = scalar_lea.vmem %s0, %s187
          %s189 = smul.u32 32, %s14
        $region36: #{tpu_custom_call.1} parent=31 // pred_fallthru
          _
      $region32: #{tpu_custom_call.1} parent=5 // pred_fallthru
        _
      %p190 = scmp.le.s32.totalorder 1, %s14
      %p191 = scmp.lt.s32.totalorder %s14, 3
      %p192 = pnand %p190, %p191
      %p193 = pneg %p192
      // Predicated region
      $region37: #{tpu_custom_call.1} parent=5 // pred_check
        _
      $region38: #{tpu_custom_call.1} parent=5 // pred_check_branch
        %195 = sbr.rel (%p192) target = $region40
      $region39: #{tpu_custom_call.1} parent=5 // pred_region
        %s196 = ssub.s32 %s14, 1
        %s197 = smul.u32 32, %s19
        %p198 = scmp.lt.s32.totalorder %s197, 63
        %s199 = scalar_select %p198, %s197, 63
        %s200 = smul.addr %s199, 8
        %s201 = scalar_lea.vmem %s0, %s200
        %p202 = pneg %p40
        %p203 = pneg %p37
        %p204 = pneg %p61
        %p205 = pneg %p58
        %p206 = pneg %p82
        %p207 = pneg %p79
        %p208 = pneg %p103
        %p209 = pneg %p100
        %p210 = pneg %p124
        %p211 = pneg %p121
        %p212 = pneg %p150
        %p213 = pneg %p147
        %s214 = sand.u32 %s137, 1
        %s215 = scalar_lea.sflag [#allocation3], %s214
        %s216 = sand.u32 %s137, 1
        %s217 = smul.addr %s216, 2
        %s218 = scalar_lea.vmem [#allocation2], %s217
        %s219 = smul.u32 32, %s19
        %p220 = scmp.lt.s32.totalorder %s219, 63
        %s221 = scalar_select %p220, %s219, 63
        %s222 = smul.addr %s221, 8
        %s223 = scalar_lea.vmem %s0, %s222
        %s224 = smul.u32 32, %s19
        %v225 = vld [vmem:[%s223] sm:$0xff]
        %v226 = vld [vmem:[%s223 + $0x8] sm:$0xff]
        %v227 = vld [vmem:[%s223 + $0x10] sm:$0xff]
        %v228 = vld [vmem:[%s223 + $0x18] sm:$0xff]
        %v229 = vld [vmem:[%s223 + $0x20] sm:$0xff]
        %v230 = vld [vmem:[%s223 + $0x28] sm:$0xff]
        %v231 = vld [vmem:[%s223 + $0x30] sm:$0xff]
        %v232 = vld [vmem:[%s223 + $0x38] sm:$0xff]
        %v233 = vld [vmem:[%s223 + $0x40] sm:$0xff]
        %v234 = vld [vmem:[%s223 + $0x48] sm:$0xff]
        %v235 = vld [vmem:[%s223 + $0x50] sm:$0xff]
        %v236 = vld [vmem:[%s223 + $0x58] sm:$0xff]
        %v237 = vld [vmem:[%s223 + $0x60] sm:$0xff]
        %v238 = vld [vmem:[%s223 + $0x68] sm:$0xff]
        %v239 = vld [vmem:[%s223 + $0x70] sm:$0xff]
        %v240 = vld [vmem:[%s223 + $0x78] sm:$0xff]
        %v241 = vld [vmem:[%s223 + $0x80] sm:$0xff]
        %v242 = vld [vmem:[%s223 + $0x88] sm:$0xff]
        %v243 = vld [vmem:[%s223 + $0x90] sm:$0xff]
        %v244 = vld [vmem:[%s223 + $0x98] sm:$0xff]
        %v245 = vld [vmem:[%s223 + $0xa0] sm:$0xff]
        %v246 = vld [vmem:[%s223 + $0xa8] sm:$0xff]
        %v247 = vld [vmem:[%s223 + $0xb0] sm:$0xff]
        %v248 = vld [vmem:[%s223 + $0xb8] sm:$0xff]
        %v249 = vld [vmem:[%s223 + $0xc0] sm:$0xff]
        %v250 = vld [vmem:[%s223 + $0xc8] sm:$0xff]
        %v251 = vld [vmem:[%s223 + $0xd0] sm:$0xff]
        %v252 = vld [vmem:[%s223 + $0xd8] sm:$0xff]
        %v253 = vld [vmem:[%s223 + $0xe0] sm:$0xff]
        %v254 = vld [vmem:[%s223 + $0xe8] sm:$0xff]
        %v255 = vld [vmem:[%s223 + $0xf0] sm:$0xff]
        %v256 = vld [vmem:[%s223 + $0xf8] sm:$0xff]
        %v257 = vld [vmem:[%s1] sm:$0xff]
        %v258 = vld [vmem:[%s1 + $0x8] sm:$0xff]
        %v259 = vld [vmem:[%s1 + $0x10] sm:$0xff]
        %v260 = vld [vmem:[%s1 + $0x18] sm:$0xff]
        %v261 = vld [vmem:[%s2] sm:$0x1]
        %v263 = vperm.slane %v261, 0
        %vm265 = vcmask 261120
        %v267 = vsel %vm265, %v225, 0
        %v270 = vsel %vm265, %v226, 0
        %v273 = vsel %vm265, %v227, 0
        %v276 = vsel %vm265, %v228, 0
        %v279 = vsel %vm265, %v229, 0
        %v282 = vsel %vm265, %v230, 0
        %v285 = vsel %vm265, %v231, 0
        %v288 = vsel %vm265, %v232, 0
        %v291 = vsel %vm265, %v233, 0
        %v294 = vsel %vm265, %v234, 0
        %v297 = vsel %vm265, %v235, 0
        %v300 = vsel %vm265, %v236, 0
        %v303 = vsel %vm265, %v237, 0
        %v306 = vsel %vm265, %v238, 0
        %v309 = vsel %vm265, %v239, 0
        %v312 = vsel %vm265, %v240, 0
        %v315 = vsel %vm265, %v241, 0
        %v318 = vsel %vm265, %v242, 0
        %v321 = vsel %vm265, %v243, 0
        %v324 = vsel %vm265, %v244, 0
        %v327 = vsel %vm265, %v245, 0
        %v330 = vsel %vm265, %v246, 0
        %v333 = vsel %vm265, %v247, 0
        %v336 = vsel %vm265, %v248, 0
        %v339 = vsel %vm265, %v249, 0
        %v342 = vsel %vm265, %v250, 0
        %v345 = vsel %vm265, %v251, 0
        %v348 = vsel %vm265, %v252, 0
        %v351 = vsel %vm265, %v253, 0
        %v354 = vsel %vm265, %v254, 0
        %v357 = vsel %vm265, %v255, 0
        %v360 = vsel %vm265, %v256, 0
        %362 = vmatpush.msra.mxu0 0.0
        %363 = vmatpush.msra.mxu0 0.0
        %364 = vmatpush.msra.mxu0 0.0
        %365 = vmatpush.msra.mxu0 0.0
        %366 = vmatpush.msra.mxu0 0.0
        %367 = vmatpush.msra.mxu0 0.0
        %368 = vmatpush.msra.mxu0 0.0
        %369 = vmatpush.msra.mxu0 0.0
        %370 = vmatpush.msra.mxu0 0.0
        %371 = vmatpush.msra.mxu0 0.0
        %372 = vmatpush.msra.mxu0 0.0
        %373 = vmatpush.msra.mxu0 0.0
        %374 = vmatpush.msra.mxu0 %v260
        %375 = vmatpush.msra.mxu0 %v259
        %376 = vmatpush.msra.mxu0 %v258
        %377 = vmatpush.msra.mxu0 %v257
        %378 = vmatmul.f32.gmra.mxu0 %v267
        %v379 = vpop.f32.mrf.mxu0
        %v380 = vadd.f32 %v263, %v379
        %381 = vmatmul.f32.gmra.mxu0 %v270
        %v382 = vpop.f32.mrf.mxu0
        %v383 = vadd.f32 %v263, %v382
        %384 = vmatmul.f32.gmra.mxu0 %v273
        %v385 = vpop.f32.mrf.mxu0
        %v386 = vadd.f32 %v263, %v385
        %387 = vmatmul.f32.gmra.mxu0 %v276
        %v388 = vpop.f32.mrf.mxu0
        %v389 = vadd.f32 %v263, %v388
        %390 = vmatmul.f32.gmra.mxu0 %v279
        %v391 = vpop.f32.mrf.mxu0
        %v392 = vadd.f32 %v263, %v391
        %393 = vmatmul.f32.gmra.mxu0 %v282
        %v394 = vpop.f32.mrf.mxu0
        %v395 = vadd.f32 %v263, %v394
        %396 = vmatmul.f32.gmra.mxu0 %v285
        %v397 = vpop.f32.mrf.mxu0
        %v398 = vadd.f32 %v263, %v397
        %399 = vmatmul.f32.gmra.mxu0 %v288
        %v400 = vpop.f32.mrf.mxu0
        %v401 = vadd.f32 %v263, %v400
        %402 = vmatmul.f32.gmra.mxu0 %v291
        %v403 = vpop.f32.mrf.mxu0
        %v404 = vadd.f32 %v263, %v403
        %405 = vmatmul.f32.gmra.mxu0 %v294
        %v406 = vpop.f32.mrf.mxu0
        %v407 = vadd.f32 %v263, %v406
        %408 = vmatmul.f32.gmra.mxu0 %v297
        %v409 = vpop.f32.mrf.mxu0
        %v410 = vadd.f32 %v263, %v409
        %411 = vmatmul.f32.gmra.mxu0 %v300
        %v412 = vpop.f32.mrf.mxu0
        %v413 = vadd.f32 %v263, %v412
        %414 = vmatmul.f32.gmra.mxu0 %v303
        %v415 = vpop.f32.mrf.mxu0
        %v416 = vadd.f32 %v263, %v415
        %417 = vmatmul.f32.gmra.mxu0 %v306
        %v418 = vpop.f32.mrf.mxu0
        %v419 = vadd.f32 %v263, %v418
        %420 = vmatmul.f32.gmra.mxu0 %v309
        %v421 = vpop.f32.mrf.mxu0
        %v422 = vadd.f32 %v263, %v421
        %423 = vmatmul.f32.gmra.mxu0 %v312
        %v424 = vpop.f32.mrf.mxu0
        %v425 = vadd.f32 %v263, %v424
        %426 = vmatmul.f32.gmra.mxu0 %v315
        %v427 = vpop.f32.mrf.mxu0
        %v428 = vadd.f32 %v263, %v427
        %429 = vmatmul.f32.gmra.mxu0 %v318
        %v430 = vpop.f32.mrf.mxu0
        %v431 = vadd.f32 %v263, %v430
        %432 = vmatmul.f32.gmra.mxu0 %v321
        %v433 = vpop.f32.mrf.mxu0
        %v434 = vadd.f32 %v263, %v433
        %435 = vmatmul.f32.gmra.mxu0 %v324
        %v436 = vpop.f32.mrf.mxu0
        %v437 = vadd.f32 %v263, %v436
        %438 = vmatmul.f32.gmra.mxu0 %v327
        %v439 = vpop.f32.mrf.mxu0
        %v440 = vadd.f32 %v263, %v439
        %441 = vmatmul.f32.gmra.mxu0 %v330
        %v442 = vpop.f32.mrf.mxu0
        %v443 = vadd.f32 %v263, %v442
        %444 = vmatmul.f32.gmra.mxu0 %v333
        %v445 = vpop.f32.mrf.mxu0
        %v446 = vadd.f32 %v263, %v445
        %447 = vmatmul.f32.gmra.mxu0 %v336
        %v448 = vpop.f32.mrf.mxu0
        %v449 = vadd.f32 %v263, %v448
        %450 = vmatmul.f32.gmra.mxu0 %v339
        %v451 = vpop.f32.mrf.mxu0
        %v452 = vadd.f32 %v263, %v451
        %453 = vmatmul.f32.gmra.mxu0 %v342
        %v454 = vpop.f32.mrf.mxu0
        %v455 = vadd.f32 %v263, %v454
        %456 = vmatmul.f32.gmra.mxu0 %v345
        %v457 = vpop.f32.mrf.mxu0
        %v458 = vadd.f32 %v263, %v457
        %459 = vmatmul.f32.gmra.mxu0 %v348
        %v460 = vpop.f32.mrf.mxu0
        %v461 = vadd.f32 %v263, %v460
        %462 = vmatmul.f32.gmra.mxu0 %v351
        %v463 = vpop.f32.mrf.mxu0
        %v464 = vadd.f32 %v263, %v463
        %465 = vmatmul.f32.gmra.mxu0 %v354
        %v466 = vpop.f32.mrf.mxu0
        %v467 = vadd.f32 %v263, %v466
        %468 = vmatmul.f32.gmra.mxu0 %v357
        %v469 = vpop.f32.mrf.mxu0
        %v470 = vadd.f32 %v263, %v469
        %471 = vmatmul.f32.gmra.mxu0 %v360
        %v472 = vpop.f32.mrf.mxu0
        %v473 = vadd.f32 %v263, %v472
        %474 = vdwg.mxu0
        %v475 = vmax.f32 %v380, 0.0
        %v476 = vmax.f32 %v383, 0.0
        %v477 = vmax.f32 %v386, 0.0
        %v478 = vmax.f32 %v389, 0.0
        %v479 = vmax.f32 %v392, 0.0
        %v480 = vmax.f32 %v395, 0.0
        %v481 = vmax.f32 %v398, 0.0
        %v482 = vmax.f32 %v401, 0.0
        %v483 = vmax.f32 %v404, 0.0
        %v484 = vmax.f32 %v407, 0.0
        %v485 = vmax.f32 %v410, 0.0
        %v486 = vmax.f32 %v413, 0.0
        %v487 = vmax.f32 %v416, 0.0
        %v488 = vmax.f32 %v419, 0.0
        %v489 = vmax.f32 %v422, 0.0
        %v490 = vmax.f32 %v425, 0.0
        %v491 = vmax.f32 %v428, 0.0
        %v492 = vmax.f32 %v431, 0.0
        %v493 = vmax.f32 %v434, 0.0
        %v494 = vmax.f32 %v437, 0.0
        %v495 = vmax.f32 %v440, 0.0
        %v496 = vmax.f32 %v443, 0.0
        %v497 = vmax.f32 %v446, 0.0
        %v498 = vmax.f32 %v449, 0.0
        %v499 = vmax.f32 %v452, 0.0
        %v500 = vmax.f32 %v455, 0.0
        %v501 = vmax.f32 %v458, 0.0
        %v502 = vmax.f32 %v461, 0.0
        %v503 = vmax.f32 %v464, 0.0
        %v504 = vmax.f32 %v467, 0.0
        %v505 = vmax.f32 %v470, 0.0
        %v506 = vmax.f32 %v473, 0.0
        %v507 = vld [vmem:[%s3] sm:$0xff]
        %v508 = vld [vmem:[%s3 + $0x8] sm:$0xff]
        %v509 = vld [vmem:[%s4] sm:$0x1]
        %v511 = vperm.slane %v509, 0
        %vm513 = vcmask 130048
        %v515 = vsel %vm513, %v475, 0
        %v518 = vsel %vm513, %v476, 0
        %v521 = vsel %vm513, %v477, 0
        %v524 = vsel %vm513, %v478, 0
        %v527 = vsel %vm513, %v479, 0
        %v530 = vsel %vm513, %v480, 0
        %v533 = vsel %vm513, %v481, 0
        %v536 = vsel %vm513, %v482, 0
        %v539 = vsel %vm513, %v483, 0
        %v542 = vsel %vm513, %v484, 0
        %v545 = vsel %vm513, %v485, 0
        %v548 = vsel %vm513, %v486, 0
        %v551 = vsel %vm513, %v487, 0
        %v554 = vsel %vm513, %v488, 0
        %v557 = vsel %vm513, %v489, 0
        %v560 = vsel %vm513, %v490, 0
        %v563 = vsel %vm513, %v491, 0
        %v566 = vsel %vm513, %v492, 0
        %v569 = vsel %vm513, %v493, 0
        %v572 = vsel %vm513, %v494, 0
        %v575 = vsel %vm513, %v495, 0
        %v578 = vsel %vm513, %v496, 0
        %v581 = vsel %vm513, %v497, 0
        %v584 = vsel %vm513, %v498, 0
        %v587 = vsel %vm513, %v499, 0
        %v590 = vsel %vm513, %v500, 0
        %v593 = vsel %vm513, %v501, 0
        %v596 = vsel %vm513, %v502, 0
        %v599 = vsel %vm513, %v503, 0
        %v602 = vsel %vm513, %v504, 0
        %v605 = vsel %vm513, %v505, 0
        %v608 = vsel %vm513, %v506, 0
        %610 = vmatpush.msra.mxu0 0.0
        %611 = vmatpush.msra.mxu0 0.0
        %612 = vmatpush.msra.mxu0 0.0
        %613 = vmatpush.msra.mxu0 0.0
        %614 = vmatpush.msra.mxu0 0.0
        %615 = vmatpush.msra.mxu0 0.0
        %616 = vmatpush.msra.mxu0 0.0
        %617 = vmatpush.msra.mxu0 0.0
        %618 = vmatpush.msra.mxu0 0.0
        %619 = vmatpush.msra.mxu0 0.0
        %620 = vmatpush.msra.mxu0 0.0
        %621 = vmatpush.msra.mxu0 0.0
        %622 = vmatpush.msra.mxu0 0.0
        %623 = vmatpush.msra.mxu0 0.0
        %624 = vmatpush.msra.mxu0 %v508
        %625 = vmatpush.msra.mxu0 %v507
        %626 = vmatmul.f32.gmra.mxu0 %v515
        %v627 = vpop.f32.mrf.mxu0
        %v628 = vadd.f32 %v511, %v627
        %629 = vmatmul.f32.gmra.mxu0 %v518
        %v630 = vpop.f32.mrf.mxu0
        %v631 = vadd.f32 %v511, %v630
        %632 = vmatmul.f32.gmra.mxu0 %v521
        %v633 = vpop.f32.mrf.mxu0
        %v634 = vadd.f32 %v511, %v633
        %635 = vmatmul.f32.gmra.mxu0 %v524
        %v636 = vpop.f32.mrf.mxu0
        %v637 = vadd.f32 %v511, %v636
        %638 = vmatmul.f32.gmra.mxu0 %v527
        %v639 = vpop.f32.mrf.mxu0
        %v640 = vadd.f32 %v511, %v639
        %641 = vmatmul.f32.gmra.mxu0 %v530
        %v642 = vpop.f32.mrf.mxu0
        %v643 = vadd.f32 %v511, %v642
        %644 = vmatmul.f32.gmra.mxu0 %v533
        %v645 = vpop.f32.mrf.mxu0
        %v646 = vadd.f32 %v511, %v645
        %647 = vmatmul.f32.gmra.mxu0 %v536
        %v648 = vpop.f32.mrf.mxu0
        %v649 = vadd.f32 %v511, %v648
        %650 = vmatmul.f32.gmra.mxu0 %v539
        %v651 = vpop.f32.mrf.mxu0
        %v652 = vadd.f32 %v511, %v651
        %653 = vmatmul.f32.gmra.mxu0 %v542
        %v654 = vpop.f32.mrf.mxu0
        %v655 = vadd.f32 %v511, %v654
        %656 = vmatmul.f32.gmra.mxu0 %v545
        %v657 = vpop.f32.mrf.mxu0
        %v658 = vadd.f32 %v511, %v657
        %659 = vmatmul.f32.gmra.mxu0 %v548
        %v660 = vpop.f32.mrf.mxu0
        %v661 = vadd.f32 %v511, %v660
        %662 = vmatmul.f32.gmra.mxu0 %v551
        %v663 = vpop.f32.mrf.mxu0
        %v664 = vadd.f32 %v511, %v663
        %665 = vmatmul.f32.gmra.mxu0 %v554
        %v666 = vpop.f32.mrf.mxu0
        %v667 = vadd.f32 %v511, %v666
        %668 = vmatmul.f32.gmra.mxu0 %v557
        %v669 = vpop.f32.mrf.mxu0
        %v670 = vadd.f32 %v511, %v669
        %671 = vmatmul.f32.gmra.mxu0 %v560
        %v672 = vpop.f32.mrf.mxu0
        %v673 = vadd.f32 %v511, %v672
        %674 = vmatmul.f32.gmra.mxu0 %v563
        %v675 = vpop.f32.mrf.mxu0
        %v676 = vadd.f32 %v511, %v675
        %677 = vmatmul.f32.gmra.mxu0 %v566
        %v678 = vpop.f32.mrf.mxu0
        %v679 = vadd.f32 %v511, %v678
        %680 = vmatmul.f32.gmra.mxu0 %v569
        %v681 = vpop.f32.mrf.mxu0
        %v682 = vadd.f32 %v511, %v681
        %683 = vmatmul.f32.gmra.mxu0 %v572
        %v684 = vpop.f32.mrf.mxu0
        %v685 = vadd.f32 %v511, %v684
        %686 = vmatmul.f32.gmra.mxu0 %v575
        %v687 = vpop.f32.mrf.mxu0
        %v688 = vadd.f32 %v511, %v687
        %689 = vmatmul.f32.gmra.mxu0 %v578
        %v690 = vpop.f32.mrf.mxu0
        %v691 = vadd.f32 %v511, %v690
        %692 = vmatmul.f32.gmra.mxu0 %v581
        %v693 = vpop.f32.mrf.mxu0
        %v694 = vadd.f32 %v511, %v693
        %695 = vmatmul.f32.gmra.mxu0 %v584
        %v696 = vpop.f32.mrf.mxu0
        %v697 = vadd.f32 %v511, %v696
        %698 = vmatmul.f32.gmra.mxu0 %v587
        %v699 = vpop.f32.mrf.mxu0
        %v700 = vadd.f32 %v511, %v699
        %701 = vmatmul.f32.gmra.mxu0 %v590
        %v702 = vpop.f32.mrf.mxu0
        %v703 = vadd.f32 %v511, %v702
        %704 = vmatmul.f32.gmra.mxu0 %v593
        %v705 = vpop.f32.mrf.mxu0
        %v706 = vadd.f32 %v511, %v705
        %707 = vmatmul.f32.gmra.mxu0 %v596
        %v708 = vpop.f32.mrf.mxu0
        %v709 = vadd.f32 %v511, %v708
        %710 = vmatmul.f32.gmra.mxu0 %v599
        %v711 = vpop.f32.mrf.mxu0
        %v712 = vadd.f32 %v511, %v711
        %713 = vmatmul.f32.gmra.mxu0 %v602
        %v714 = vpop.f32.mrf.mxu0
        %v715 = vadd.f32 %v511, %v714
        %716 = vmatmul.f32.gmra.mxu0 %v605
        %v717 = vpop.f32.mrf.mxu0
        %v718 = vadd.f32 %v511, %v717
        %719 = vmatmul.f32.gmra.mxu0 %v608
        %v720 = vpop.f32.mrf.mxu0
        %v721 = vadd.f32 %v511, %v720
        %722 = vdwg.mxu0
        %vm723 = vcmask 15360
        %v724 = vsel %vm723, %v628, -inf
        %725 = vmax.xlane.f32.xlu0 %v724
        %v726 = vpop.xlane.xlu0 %725
        %v727 = vsel %vm723, %v631, -inf
        %728 = vmax.xlane.f32.xlu0 %v727
        %v729 = vpop.xlane.xlu0 %728
        %v730 = vsel %vm723, %v634, -inf
        %731 = vmax.xlane.f32.xlu0 %v730
        %v732 = vpop.xlane.xlu0 %731
        %v733 = vsel %vm723, %v637, -inf
        %734 = vmax.xlane.f32.xlu0 %v733
        %v735 = vpop.xlane.xlu0 %734
        %v736 = vsel %vm723, %v640, -inf
        %737 = vmax.xlane.f32.xlu0 %v736
        %v738 = vpop.xlane.xlu0 %737
        %v739 = vsel %vm723, %v643, -inf
        %740 = vmax.xlane.f32.xlu0 %v739
        %v741 = vpop.xlane.xlu0 %740
        %v742 = vsel %vm723, %v646, -inf
        %743 = vmax.xlane.f32.xlu0 %v742
        %v744 = vpop.xlane.xlu0 %743
        %v745 = vsel %vm723, %v649, -inf
        %746 = vmax.xlane.f32.xlu0 %v745
        %v747 = vpop.xlane.xlu0 %746
        %v748 = vsel %vm723, %v652, -inf
        %749 = vmax.xlane.f32.xlu0 %v748
        %v750 = vpop.xlane.xlu0 %749
        %v751 = vsel %vm723, %v655, -inf
        %752 = vmax.xlane.f32.xlu0 %v751
        %v753 = vpop.xlane.xlu0 %752
        %v754 = vsel %vm723, %v658, -inf
        %755 = vmax.xlane.f32.xlu0 %v754
        %v756 = vpop.xlane.xlu0 %755
        %v757 = vsel %vm723, %v661, -inf
        %758 = vmax.xlane.f32.xlu0 %v757
        %v759 = vpop.xlane.xlu0 %758
        %v760 = vsel %vm723, %v664, -inf
        %761 = vmax.xlane.f32.xlu0 %v760
        %v762 = vpop.xlane.xlu0 %761
        %v763 = vsel %vm723, %v667, -inf
        %764 = vmax.xlane.f32.xlu0 %v763
        %v765 = vpop.xlane.xlu0 %764
        %v766 = vsel %vm723, %v670, -inf
        %767 = vmax.xlane.f32.xlu0 %v766
        %v768 = vpop.xlane.xlu0 %767
        %v769 = vsel %vm723, %v673, -inf
        %770 = vmax.xlane.f32.xlu0 %v769
        %v771 = vpop.xlane.xlu0 %770
        %v772 = vsel %vm723, %v676, -inf
        %773 = vmax.xlane.f32.xlu0 %v772
        %v774 = vpop.xlane.xlu0 %773
        %v775 = vsel %vm723, %v679, -inf
        %776 = vmax.xlane.f32.xlu0 %v775
        %v777 = vpop.xlane.xlu0 %776
        %v778 = vsel %vm723, %v682, -inf
        %779 = vmax.xlane.f32.xlu0 %v778
        %v780 = vpop.xlane.xlu0 %779
        %v781 = vsel %vm723, %v685, -inf
        %782 = vmax.xlane.f32.xlu0 %v781
        %v783 = vpop.xlane.xlu0 %782
        %v784 = vsel %vm723, %v688, -inf
        %785 = vmax.xlane.f32.xlu0 %v784
        %v786 = vpop.xlane.xlu0 %785
        %v787 = vsel %vm723, %v691, -inf
        %788 = vmax.xlane.f32.xlu0 %v787
        %v789 = vpop.xlane.xlu0 %788
        %v790 = vsel %vm723, %v694, -inf
        %791 = vmax.xlane.f32.xlu0 %v790
        %v792 = vpop.xlane.xlu0 %791
        %v793 = vsel %vm723, %v697, -inf
        %794 = vmax.xlane.f32.xlu0 %v793
        %v795 = vpop.xlane.xlu0 %794
        %v796 = vsel %vm723, %v700, -inf
        %797 = vmax.xlane.f32.xlu0 %v796
        %v798 = vpop.xlane.xlu0 %797
        %v799 = vsel %vm723, %v703, -inf
        %800 = vmax.xlane.f32.xlu0 %v799
        %v801 = vpop.xlane.xlu0 %800
        %v802 = vsel %vm723, %v706, -inf
        %803 = vmax.xlane.f32.xlu0 %v802
        %v804 = vpop.xlane.xlu0 %803
        %v805 = vsel %vm723, %v709, -inf
        %806 = vmax.xlane.f32.xlu0 %v805
        %v807 = vpop.xlane.xlu0 %806
        %v808 = vsel %vm723, %v712, -inf
        %809 = vmax.xlane.f32.xlu0 %v808
        %v810 = vpop.xlane.xlu0 %809
        %v811 = vsel %vm723, %v715, -inf
        %812 = vmax.xlane.f32.xlu0 %v811
        %v813 = vpop.xlane.xlu0 %812
        %v814 = vsel %vm723, %v718, -inf
        %815 = vmax.xlane.f32.xlu0 %v814
        %v816 = vpop.xlane.xlu0 %815
        %v817 = vsel %vm723, %v721, -inf
        %818 = vmax.xlane.f32.xlu0 %v817
        %v819 = vpop.xlane.xlu0 %818
        %vm820 = vcmp.gt.f32.partialorder %v628, %v726
        %vm821 = vcmp.gt.f32.partialorder %v631, %v729
        %vm822 = vcmp.gt.f32.partialorder %v634, %v732
        %vm823 = vcmp.gt.f32.partialorder %v637, %v735
        %vm824 = vcmp.gt.f32.partialorder %v640, %v738
        %vm825 = vcmp.gt.f32.partialorder %v643, %v741
        %vm826 = vcmp.gt.f32.partialorder %v646, %v744
        %vm827 = vcmp.gt.f32.partialorder %v649, %v747
        %vm828 = vcmp.gt.f32.partialorder %v652, %v750
        %vm829 = vcmp.gt.f32.partialorder %v655, %v753
        %vm830 = vcmp.gt.f32.partialorder %v658, %v756
        %vm831 = vcmp.gt.f32.partialorder %v661, %v759
        %vm832 = vcmp.gt.f32.partialorder %v664, %v762
        %vm833 = vcmp.gt.f32.partialorder %v667, %v765
        %vm834 = vcmp.gt.f32.partialorder %v670, %v768
        %vm835 = vcmp.gt.f32.partialorder %v673, %v771
        %vm836 = vcmp.gt.f32.partialorder %v676, %v774
        %vm837 = vcmp.gt.f32.partialorder %v679, %v777
        %vm838 = vcmp.gt.f32.partialorder %v682, %v780
        %vm839 = vcmp.gt.f32.partialorder %v685, %v783
        %vm840 = vcmp.gt.f32.partialorder %v688, %v786
        %vm841 = vcmp.gt.f32.partialorder %v691, %v789
        %vm842 = vcmp.gt.f32.partialorder %v694, %v792
        %vm843 = vcmp.gt.f32.partialorder %v697, %v795
        %vm844 = vcmp.gt.f32.partialorder %v700, %v798
        %vm845 = vcmp.gt.f32.partialorder %v703, %v801
        %vm846 = vcmp.gt.f32.partialorder %v706, %v804
        %vm847 = vcmp.gt.f32.partialorder %v709, %v807
        %vm848 = vcmp.gt.f32.partialorder %v712, %v810
        %vm849 = vcmp.gt.f32.partialorder %v715, %v813
        %vm850 = vcmp.gt.f32.partialorder %v718, %v816
        %vm851 = vcmp.gt.f32.partialorder %v721, %v819
        %v852 = vsel %vm820, 1, 0
        %v853 = vsel %vm821, 1, 0
        %v854 = vsel %vm822, 1, 0
        %v855 = vsel %vm823, 1, 0
        %v856 = vsel %vm824, 1, 0
        %v857 = vsel %vm825, 1, 0
        %v858 = vsel %vm826, 1, 0
        %v859 = vsel %vm827, 1, 0
        %v860 = vsel %vm828, 1, 0
        %v861 = vsel %vm829, 1, 0
        %v862 = vsel %vm830, 1, 0
        %v863 = vsel %vm831, 1, 0
        %v864 = vsel %vm832, 1, 0
        %v865 = vsel %vm833, 1, 0
        %v866 = vsel %vm834, 1, 0
        %v867 = vsel %vm835, 1, 0
        %v868 = vsel %vm836, 1, 0
        %v869 = vsel %vm837, 1, 0
        %v870 = vsel %vm838, 1, 0
        %v871 = vsel %vm839, 1, 0
        %v872 = vsel %vm840, 1, 0
        %v873 = vsel %vm841, 1, 0
        %v874 = vsel %vm842, 1, 0
        %v875 = vsel %vm843, 1, 0
        %v876 = vsel %vm844, 1, 0
        %v877 = vsel %vm845, 1, 0
        %v878 = vsel %vm846, 1, 0
        %v879 = vsel %vm847, 1, 0
        %v880 = vsel %vm848, 1, 0
        %v881 = vsel %vm849, 1, 0
        %v882 = vsel %vm850, 1, 0
        %v883 = vsel %vm851, 1, 0
        %v884 = vcvt.s32.f32 %v852
        %v885 = vcvt.s32.f32 %v853
        %v886 = vcvt.s32.f32 %v854
        %v887 = vcvt.s32.f32 %v855
        %v888 = vcvt.s32.f32 %v856
        %v889 = vcvt.s32.f32 %v857
        %v890 = vcvt.s32.f32 %v858
        %v891 = vcvt.s32.f32 %v859
        %v892 = vcvt.s32.f32 %v860
        %v893 = vcvt.s32.f32 %v861
        %v894 = vcvt.s32.f32 %v862
        %v895 = vcvt.s32.f32 %v863
        %v896 = vcvt.s32.f32 %v864
        %v897 = vcvt.s32.f32 %v865
        %v898 = vcvt.s32.f32 %v866
        %v899 = vcvt.s32.f32 %v867
        %v900 = vcvt.s32.f32 %v868
        %v901 = vcvt.s32.f32 %v869
        %v902 = vcvt.s32.f32 %v870
        %v903 = vcvt.s32.f32 %v871
        %v904 = vcvt.s32.f32 %v872
        %v905 = vcvt.s32.f32 %v873
        %v906 = vcvt.s32.f32 %v874
        %v907 = vcvt.s32.f32 %v875
        %v908 = vcvt.s32.f32 %v876
        %v909 = vcvt.s32.f32 %v877
        %v910 = vcvt.s32.f32 %v878
        %v911 = vcvt.s32.f32 %v879
        %v912 = vcvt.s32.f32 %v880
        %v913 = vcvt.s32.f32 %v881
        %v914 = vcvt.s32.f32 %v882
        %v915 = vcvt.s32.f32 %v883
        %948 = vset.pattern.permute.xlu0 2
        %949 = vperm.xlu0 %948, %v884
        %v950 = vpop.permute.xlu0 %949
        %951 = vset.pattern.permute.xlu0 2
        %952 = vperm.xlu0 %951, %v885
        %v953 = vpop.permute.xlu0 %952
        %954 = vset.pattern.permute.xlu0 2
        %955 = vperm.xlu0 %954, %v886
        %v956 = vpop.permute.xlu0 %955
        %957 = vset.pattern.permute.xlu0 2
        %958 = vperm.xlu0 %957, %v887
        %v959 = vpop.permute.xlu0 %958
        %960 = vset.pattern.permute.xlu0 2
        %961 = vperm.xlu0 %960, %v888
        %v962 = vpop.permute.xlu0 %961
        %963 = vset.pattern.permute.xlu0 2
        %964 = vperm.xlu0 %963, %v889
        %v965 = vpop.permute.xlu0 %964
        %966 = vset.pattern.permute.xlu0 2
        %967 = vperm.xlu0 %966, %v890
        %v968 = vpop.permute.xlu0 %967
        %969 = vset.pattern.permute.xlu0 2
        %970 = vperm.xlu0 %969, %v891
        %v971 = vpop.permute.xlu0 %970
        %972 = vset.pattern.permute.xlu0 2
        %973 = vperm.xlu0 %972, %v892
        %v974 = vpop.permute.xlu0 %973
        %975 = vset.pattern.permute.xlu0 2
        %976 = vperm.xlu0 %975, %v893
        %v977 = vpop.permute.xlu0 %976
        %978 = vset.pattern.permute.xlu0 2
        %979 = vperm.xlu0 %978, %v894
        %v980 = vpop.permute.xlu0 %979
        %981 = vset.pattern.permute.xlu0 2
        %982 = vperm.xlu0 %981, %v895
        %v983 = vpop.permute.xlu0 %982
        %984 = vset.pattern.permute.xlu0 2
        %985 = vperm.xlu0 %984, %v896
        %v986 = vpop.permute.xlu0 %985
        %987 = vset.pattern.permute.xlu0 2
        %988 = vperm.xlu0 %987, %v897
        %v989 = vpop.permute.xlu0 %988
        %990 = vset.pattern.permute.xlu0 2
        %991 = vperm.xlu0 %990, %v898
        %v992 = vpop.permute.xlu0 %991
        %993 = vset.pattern.permute.xlu0 2
        %994 = vperm.xlu0 %993, %v899
        %v995 = vpop.permute.xlu0 %994
        %996 = vset.pattern.permute.xlu0 2
        %997 = vperm.xlu0 %996, %v900
        %v998 = vpop.permute.xlu0 %997
        %999 = vset.pattern.permute.xlu0 2
        %1000 = vperm.xlu0 %999, %v901
        %v1001 = vpop.permute.xlu0 %1000
        %1002 = vset.pattern.permute.xlu0 2
        %1003 = vperm.xlu0 %1002, %v902
        %v1004 = vpop.permute.xlu0 %1003
        %1005 = vset.pattern.permute.xlu0 2
        %1006 = vperm.xlu0 %1005, %v903
        %v1007 = vpop.permute.xlu0 %1006
        %1008 = vset.pattern.permute.xlu0 2
        %1009 = vperm.xlu0 %1008, %v904
        %v1010 = vpop.permute.xlu0 %1009
        %1011 = vset.pattern.permute.xlu0 2
        %1012 = vperm.xlu0 %1011, %v905
        %v1013 = vpop.permute.xlu0 %1012
        %1014 = vset.pattern.permute.xlu0 2
        %1015 = vperm.xlu0 %1014, %v906
        %v1016 = vpop.permute.xlu0 %1015
        %1017 = vset.pattern.permute.xlu0 2
        %1018 = vperm.xlu0 %1017, %v907
        %v1019 = vpop.permute.xlu0 %1018
        %1020 = vset.pattern.permute.xlu0 2
        %1021 = vperm.xlu0 %1020, %v908
        %v1022 = vpop.permute.xlu0 %1021
        %1023 = vset.pattern.permute.xlu0 2
        %1024 = vperm.xlu0 %1023, %v909
        %v1025 = vpop.permute.xlu0 %1024
        %1026 = vset.pattern.permute.xlu0 2
        %1027 = vperm.xlu0 %1026, %v910
        %v1028 = vpop.permute.xlu0 %1027
        %1029 = vset.pattern.permute.xlu0 2
        %1030 = vperm.xlu0 %1029, %v911
        %v1031 = vpop.permute.xlu0 %1030
        %1032 = vset.pattern.permute.xlu0 2
        %1033 = vperm.xlu0 %1032, %v912
        %v1034 = vpop.permute.xlu0 %1033
        %1035 = vset.pattern.permute.xlu0 2
        %1036 = vperm.xlu0 %1035, %v913
        %v1037 = vpop.permute.xlu0 %1036
        %1038 = vset.pattern.permute.xlu0 2
        %1039 = vperm.xlu0 %1038, %v914
        %v1040 = vpop.permute.xlu0 %1039
        %1041 = vset.pattern.permute.xlu0 2
        %1042 = vperm.xlu0 %1041, %v915
        %v1043 = vpop.permute.xlu0 %1042
        %v1044 = vlaneseq
        %v1045 = vand.u32 %v1044, 127
        %v1046 = vperm.slane %v950, %v1045
        %v1047 = vadd.s32 %v1045, 4294967288
        %v1048 = vperm.slane %v953, %v1047
        %vm1049 = vcmask 130112
        %v1050 = vsel %vm1049, %v1048, %v1046
        %v1051 = vadd.s32 %v1045, 4294967280
        %v1052 = vperm.slane %v956, %v1051
        %vm1053 = vcmask 195712
        %v1054 = vsel %vm1053, %v1052, %v1050
        %v1055 = vadd.s32 %v1045, 4294967272
        %v1056 = vperm.slane %v959, %v1055
        %vm1057 = vcmask 261312
        %v1058 = vsel %vm1057, %v1056, %v1054
        %v1059 = vadd.s32 %v1045, 4294967264
        %v1060 = vperm.slane %v962, %v1059
        %vm1061 = vcmask 326912
        %v1062 = vsel %vm1061, %v1060, %v1058
        %v1063 = vadd.s32 %v1045, 4294967256
        %v1064 = vperm.slane %v965, %v1063
        %vm1065 = vcmask 392512
        %v1066 = vsel %vm1065, %v1064, %v1062
        %v1067 = vadd.s32 %v1045, 4294967248
        %v1068 = vperm.slane %v968, %v1067
        %vm1069 = vcmask 458112
        %v1070 = vsel %vm1069, %v1068, %v1066
        %v1071 = vadd.s32 %v1045, 4294967240
        %v1072 = vperm.slane %v971, %v1071
        %vm1073 = vcmask 523712
        %v1074 = vsel %vm1073, %v1072, %v1070
        %v1075 = vadd.s32 %v1045, 4294967232
        %v1076 = vperm.slane %v974, %v1075
        %vm1077 = vcmask 589312
        %v1078 = vsel %vm1077, %v1076, %v1074
        %v1079 = vadd.s32 %v1045, 4294967224
        %v1080 = vperm.slane %v977, %v1079
        %vm1081 = vcmask 654912
        %v1082 = vsel %vm1081, %v1080, %v1078
        %v1083 = vadd.s32 %v1045, 4294967216
        %v1084 = vperm.slane %v980, %v1083
        %vm1085 = vcmask 720512
        %v1086 = vsel %vm1085, %v1084, %v1082
        %v1087 = vadd.s32 %v1045, 4294967208
        %v1088 = vperm.slane %v983, %v1087
        %vm1089 = vcmask 786112
        %v1090 = vsel %vm1089, %v1088, %v1086
        %v1091 = vadd.s32 %v1045, 4294967200
        %v1092 = vperm.slane %v986, %v1091
        %vm1093 = vcmask 851712
        %v1094 = vsel %vm1093, %v1092, %v1090
        %v1095 = vadd.s32 %v1045, 4294967192
        %v1096 = vperm.slane %v989, %v1095
        %vm1097 = vcmask 917312
        %v1098 = vsel %vm1097, %v1096, %v1094
        %v1099 = vadd.s32 %v1045, 4294967184
        %v1100 = vperm.slane %v992, %v1099
        %vm1101 = vcmask 982912
        %v1102 = vsel %vm1101, %v1100, %v1098
        %v1103 = vadd.s32 %v1045, 4294967176
        %v1104 = vperm.slane %v995, %v1103
        %vm1105 = vcmask 1048512
        %v1106 = vsel %vm1105, %v1104, %v1102
        %v1107 = vperm.slane %v998, %v1045
        %v1108 = vperm.slane %v1001, %v1047
        %v1109 = vsel %vm1049, %v1108, %v1107
        %v1110 = vperm.slane %v1004, %v1051
        %v1111 = vsel %vm1053, %v1110, %v1109
        %v1112 = vperm.slane %v1007, %v1055
        %v1113 = vsel %vm1057, %v1112, %v1111
        %v1114 = vperm.slane %v1010, %v1059
        %v1115 = vsel %vm1061, %v1114, %v1113
        %v1116 = vperm.slane %v1013, %v1063
        %v1117 = vsel %vm1065, %v1116, %v1115
        %v1118 = vperm.slane %v1016, %v1067
        %v1119 = vsel %vm1069, %v1118, %v1117
        %v1120 = vperm.slane %v1019, %v1071
        %v1121 = vsel %vm1073, %v1120, %v1119
        %v1122 = vperm.slane %v1022, %v1075
        %v1123 = vsel %vm1077, %v1122, %v1121
        %v1124 = vperm.slane %v1025, %v1079
        %v1125 = vsel %vm1081, %v1124, %v1123
        %v1126 = vperm.slane %v1028, %v1083
        %v1127 = vsel %vm1085, %v1126, %v1125
        %v1128 = vperm.slane %v1031, %v1087
        %v1129 = vsel %vm1089, %v1128, %v1127
        %v1130 = vperm.slane %v1034, %v1091
        %v1131 = vsel %vm1093, %v1130, %v1129
        %v1132 = vperm.slane %v1037, %v1095
        %v1133 = vsel %vm1097, %v1132, %v1131
        %v1134 = vperm.slane %v1040, %v1099
        %v1135 = vsel %vm1101, %v1134, %v1133
        %v1136 = vperm.slane %v1043, %v1103
        %v1137 = vsel %vm1105, %v1136, %v1135
        %vm1138 = vcmask 1041409
        %v1139 = vsel %vm1138, %v1137, %v1106
        %1141 = vst [vmem:[%s218] sm:$0x3] %v1139
        %s1142 = sand.u32 %s137, 1
        %s1143 = scalar_lea.sflag [#allocation3], %s1142
        %s1144 = sand.u32 %s137, 1
        %s1145 = smul.addr %s1144, 2
        %s1146 = scalar_lea.vmem [#allocation2], %s1145
        // Predicated region
        $region41: #{tpu_custom_call.1} parent=39 // pred_check
          %p1147 = pneg %p147
        $region42: #{tpu_custom_call.1} parent=39 // pred_check_branch
          %1149 = sbr.rel (%p1147) target = $region44
        $region43: #{tpu_custom_call.1} parent=39 // pred_region
          %1151 = vsyncadd %s1143, 0
          %s1152 = smul.addr %s19, 2
          %s1153 = scalar_lea.hbm %s5, %s1152
          %s1155 = sshll.u32 %s1146, 4
          %s1156 = int_to_ptr.vmem [resolvable:$true] %s1155
          %s1157 = sshll.u32 %s1153, 4
          %s1158 = int_to_ptr.hbm [resolvable:$true] %s1157
          %1160 = dma.vmem_to_hbm [thread:$0]  %s1156, 32, %s1158, %s1143
        $region44: #{tpu_custom_call.1} parent=39 // pred_fallthru
          _
      $region40: #{tpu_custom_call.1} parent=5 // pred_fallthru
        _
      %p1161 = scmp.le.s32.totalorder 2, %s14
      // Predicated region
      $region45: #{tpu_custom_call.1} parent=5 // pred_check
        %p1162 = pneg %p1161
      $region46: #{tpu_custom_call.1} parent=5 // pred_check_branch
        %1164 = sbr.rel (%p1162) target = $region48
      $region47: #{tpu_custom_call.1} parent=5 // pred_region
        %s1165 = ssub.s32 %s14, 2
        // Predicated region
        $region49: #{tpu_custom_call.1} parent=47 // pred_check
          %p1166 = pneg %p153
        $region50: #{tpu_custom_call.1} parent=47 // pred_check_branch
          %1168 = sbr.rel (%p1166) target = $region52
        $region51: #{tpu_custom_call.1} parent=47 // pred_region
          %s1169 = sand.u32 %s138, 1
          %s1170 = scalar_lea.sflag [#allocation3], %s1169
          %s1171 = sand.u32 %s138, 1
          %s1172 = smul.addr %s1171, 2
          %s1173 = scalar_lea.vmem [#allocation2], %s1172
          %1175 = dma.done %s1170, 32
        $region52: #{tpu_custom_call.1} parent=47 // pred_fallthru
          _
      $region48: #{tpu_custom_call.1} parent=5 // pred_fallthru
        _
    $region6: #{tpu_custom_call.1} parent=1 // loop_footer
      %s18 = sadd.s32 1, %s14
    $region7: #{tpu_custom_call.1} parent=1 // loop_footer_branch
      %13 = sbr.rel target = $region3
    $region8: #{tpu_custom_call.1} parent=1 // loop_exit
      _
    %1176 = vsyncpa [#allocation3], 1
    %s1177 = scalar_lea.sflag [#allocation3], 1
    %1178 = vsyncpa %s1177, 1

</llo_original>
